<compile_context>
chip_gen: v7x
topology: tpu7x:2x2x1
jax: 0.10.0
libtpu: 0.0.40
codegen_flags: <defaults>
</compile_context>

<pallas_src>
import math

import jax
import jax.numpy as jnp
from jax.experimental import pallas as pl
from jax.experimental.pallas import tpu as pltpu


def _add_pos_kernel(x_ref, pos_ref, o_ref):
    # x_ref / o_ref: (tB, tL, Hp) tile; pos_ref: (tL, Hp), broadcast over batch.
    o_ref[...] = (x_ref[...] + pos_ref[...]).astype(o_ref.dtype)


def _chip_params():
    """(per-stream tile budget, scoped-VMEM cap, XLA-fallback bytes, #TC hint)."""
    kind = ""
    try:
        kind = jax.devices()[0].device_kind.lower()
    except Exception:
        pass
    if "v7" in kind:   # 64 MiB VMEM / TC, ~3.2 TB/s HBM, 2 TensorCores.
        return 4 << 20, 48 << 20, 4 << 20, 2
    if "v6" in kind:   # 128 MiB VMEM, 32 MiB default scoped limit.
        return 4 << 20, 64 << 20, 2 << 20, 1
    if "v5" in kind:   # v5e: 16 MiB default scoped limit -> keep tiles small.
        return 2 << 20, 48 << 20, 1 << 20, 1
    return 2 << 20, 48 << 20, 1 << 20, 1  # unknown: conservative.


def _sublane_multiple(itemsize: int) -> int:
    # Rows packed per vreg sublane: f32 -> 8, bf16/f16 -> 16, int8/fp8 -> 32.
    return {4: 8, 2: 16, 1: 32}.get(itemsize, 8)


def _choose_tiles(B, Lp, Hp, itemsize, stream_budget, num_tc):
    s = _sublane_multiple(itemsize)
    row_bytes = Hp * itemsize
    max_rows = max(1, stream_budget // row_bytes)

    # Sequence tile: whole (folded) sequence if it fits, otherwise the largest
    # sublane-aligned tile, preferring one that divides Lp exactly (no masked
    # edge block).
    if Lp <= max_rows:
        tL = Lp
    else:
        tL = 0
        cand = (max_rows // s) * s
        while cand >= s:
            if Lp % cand == 0:
                tL = cand
                break
            cand -= s
        if tL == 0:
            tL = max(s, (max_rows // s) * s)  # edge block masked; still correct.

    # Batch tile: fold batch into the block while the x/out tile fits budget.
    tB = 1
    while tB < B and (tB + 1) * tL * row_bytes <= stream_budget:
        tB += 1
    while tB > 1 and B % tB != 0:
        tB -= 1

    # v7x: guarantee >=2 grid steps along a parallel axis so both TCs get work.
    if num_tc >= 2 and pl.cdiv(Lp, tL) * pl.cdiv(B, tB) < num_tc:
        if B >= 2:
            tB = -(-B // 2)                      # exactly 2 batch blocks
        elif tL > s and Lp >= 2 * s:
            tL = max(s, ((tL // 2) // s) * s)    # split the sequence instead
    return tB, tL


def add_position_embs(inputs: jax.Array, pos_embedding: jax.Array,
                      *, force_kernel: bool = False) -> jax.Array:
    """inputs: (B, L, H); pos_embedding: (1, max_len, H). Returns (B, L, H)."""
    assert inputs.ndim == 3, (
        f"Number of dimensions should be 3, but it is: {inputs.ndim}"
    )
    B, L, H = inputs.shape
    assert pos_embedding.ndim == 3 and pos_embedding.shape[0] == 1, (
        f"pos_embedding must be (1, max_len, H), got {pos_embedding.shape}"
    )
    assert pos_embedding.shape[2] == H, (
        f"hidden mismatch: inputs H={H}, pos H={pos_embedding.shape[2]}"
    )
    max_len = pos_embedding.shape[1]
    assert L <= max_len, f"sequence length {L} exceeds max_len {max_len}"

    itemsize = jnp.dtype(inputs.dtype).itemsize
    stream_budget, vmem_cap, fallback_bytes, num_tc = _chip_params()

    # Tiny problems: let XLA fuse the broadcast add; the pallas_call launch /
    # custom-call boundary dominates well below this size.
    if not force_kernel and inputs.size * itemsize < fallback_bytes:
        return inputs + pos_embedding[:, :L, :].astype(inputs.dtype)

    # Lane-density fold: make the minor (lane) dim a multiple of 128; widen
    # beyond the minimal factor for fewer, longer vector rows.
    fold = 1
    if H % 128 != 0:
        f = 128 // math.gcd(H, 128)  # smallest f with (f * H) % 128 == 0
        if L % f == 0:
            fold = f
            while fold * 2 * H <= 1024 and L % (fold * 2) == 0:
                fold *= 2
        else:
            # No lane-dense layout possible: every store would be a masked
            # partial store.  XLA's fused broadcast-add matches or beats the
            # kernel here, so fall back.
            return inputs + pos_embedding[:, :L, :].astype(inputs.dtype)

    Lp, Hp = L // fold, H * fold
    x = inputs.reshape(B, Lp, Hp) if fold > 1 else inputs

    tB, tL = _choose_tiles(B, Lp, Hp, itemsize, stream_budget, num_tc)
    num_l = pl.cdiv(Lp, tL)
    num_b = pl.cdiv(B, tB)

    # pos preparation: cast to inputs.dtype in the wrapper so the pos DMA moves
    # the narrow width.  On the aligned no-fold path with matching dtype, pass
    # the full table and let the index_map restrict to the first L rows.
    if fold > 1:
        pos = pos_embedding[:, :L, :].astype(inputs.dtype).reshape(1, Lp, Hp)
    elif tL % 8 == 0 and pos_embedding.dtype == inputs.dtype:
        pos = pos_embedding
    else:
        pos = pos_embedding[:, :L, :].astype(inputs.dtype)

    # Explicit scoped-VMEM limit sized to the double-buffered working set.
    x_tile_bytes = tB * tL * Hp * itemsize
    pos_tile_bytes = tL * Hp * itemsize
    needed = 4 * x_tile_bytes + 2 * pos_tile_bytes + (2 << 20)
    vmem_limit = int(min(vmem_cap, max(needed, 16 << 20)))

    cost = pl.CostEstimate(
        flops=B * Lp * Hp,
        transcendentals=0,
        bytes_accessed=(2 * B * Lp * Hp + Lp * Hp) * itemsize,
    )

    out = pl.pallas_call(
        _add_pos_kernel,
        out_shape=jax.ShapeDtypeStruct((B, Lp, Hp), inputs.dtype),
        grid_spec=pltpu.PrefetchScalarGridSpec(
            num_scalar_prefetch=0,
            # batch innermost: the pos block index is constant over it, so the
            # pos tile is DMA'd once per L-tile, not once per (l, b).
            grid=(num_l, num_b),
            in_specs=[
                pl.BlockSpec((tB, tL, Hp), lambda l, b: (b, l, 0)),
                pl.BlockSpec((pl.Squeezed(), tL, Hp), lambda l, b: (0, l, 0)),
            ],
            out_specs=pl.BlockSpec((tB, tL, Hp), lambda l, b: (b, l, 0)),
        ),
        compiler_params=pltpu.CompilerParams(
            dimension_semantics=("parallel", "parallel"),
            vmem_limit_bytes=vmem_limit,
        ),
        cost_estimate=cost,
    )(x, pos)

    return out.reshape(B, L, H) if fold > 1 else out


if __name__ == "__main__":
    # TransformerConfig defaults: hidden_dim=16, max_len=1001.
    hidden_dim, max_len = 16, 1001

    key = jax.random.PRNGKey(0)
    k_pos, k_x, k_x2, k_x3, k_pos4, k_x4, k_pos5, k_x5 = jax.random.split(key, 8)

    # Parameter init mirroring torch.randn(1, max_len, hidden) * 0.02.
    pos_embedding = (
        jax.random.normal(k_pos, (1, max_len, hidden_dim), dtype=jnp.float32) * 0.02
    )

    # 1) Module-default demo shape (B=2, L=8, H=16): folded lane-dense path,
    #    batch folded into the block. force_kernel so Pallas actually runs.
    x = jax.random.normal(k_x, (2, 8, hidden_dim), dtype=jnp.float32)
    out = jax.block_until_ready(add_position_embs(x, pos_embedding, force_kernel=True))
    ref = x + pos_embedding[:, :8, :]
    assert out.shape == x.shape
    assert jnp.allclose(out, ref, atol=1e-6), "mismatch (demo shape)"

    # 2) Longer sequence: wider fold (Hp up to 1024) + batch blocking.
    x2 = jax.random.normal(k_x2, (2, 256, hidden_dim), dtype=jnp.float32)
    out2 = jax.block_until_ready(add_position_embs(x2, pos_embedding, force_kernel=True))
    ref2 = x2 + pos_embedding[:, :256, :]
    assert jnp.allclose(out2, ref2, atol=1e-6), "mismatch (long seq)"

    # 3) bf16 inputs + f32 pos: pos is cast in the wrapper (narrow DMA).
    x3 = jax.random.normal(k_x3, (2, 256, hidden_dim), dtype=jnp.bfloat16)
    out3 = jax.block_until_ready(add_position_embs(x3, pos_embedding, force_kernel=True))
    ref3 = x3 + pos_embedding[:, :256, :].astype(jnp.bfloat16)
    assert out3.dtype == jnp.bfloat16
    assert jnp.allclose(out3.astype(jnp.float32), ref3.astype(jnp.float32),
                        atol=1e-6), "mismatch (bf16)"

    # 4) Lane-aligned hidden (H=128): no-fold kernel path, full pos table
    #    restricted via the index_map.
    pos4 = jax.random.normal(k_pos4, (1, 100, 128), dtype=jnp.float32) * 0.02
    x4 = jax.random.normal(k_x4, (2, 64, 128), dtype=jnp.float32)
    out4 = jax.block_until_ready(add_position_embs(x4, pos4, force_kernel=True))
    ref4 = x4 + pos4[:, :64, :]
    assert jnp.allclose(out4, ref4, atol=1e-6), "mismatch (H=128)"

    # 5) No lane-dense layout possible (H=48, L=20): XLA-fallback path.
    pos5 = jax.random.normal(k_pos5, (1, 64, 48), dtype=jnp.float32) * 0.02
    x5 = jax.random.normal(k_x5, (2, 20, 48), dtype=jnp.float32)
    out5 = jax.block_until_ready(add_position_embs(x5, pos5, force_kernel=True))
    ref5 = x5 + pos5[:, :20, :]
    assert jnp.allclose(out5, ref5, atol=1e-6), "mismatch (fallback)"

    print("KERNEL_OK")
</pallas_src>

<mosaic_0001>
module attributes {stable_mosaic.version = 11 : i64} {
  func.func @_add_pos_kernel(%arg0: i32, %arg1: i32, %arg2: memref<2x1x128xf32, #tpu.memory_space<vmem>>, %arg3: memref<1x1x128xf32, #tpu.memory_space<vmem>>, %arg4: memref<2x1x128xf32, #tpu.memory_space<vmem>>) attributes {dimension_semantics = [#tpu.dimension_semantics<parallel>, #tpu.dimension_semantics<parallel>], iteration_bounds = array<i64: 1, 1>, scalar_prefetch = 0 : i64, scratch_operands = 0 : i64, tpu.core_type = #tpu.core_type<tc>, window_params = [{transform_indices = @transform_0, window_bounds = array<i64: 2, 1, 128>}, {transform_indices = @transform_1, window_bounds = array<i64: 1, 1, 128>}, {transform_indices = @transform_2, window_bounds = array<i64: 2, 1, 128>}]} {
    %c0 = arith.constant 0 : index
    %c0_0 = arith.constant 0 : index
    %c0_1 = arith.constant 0 : index
    %0 = vector.load %arg2[%c0, %c0_0, %c0_1] : memref<2x1x128xf32, #tpu.memory_space<vmem>>, vector<2x1x128xf32>
    %c0_2 = arith.constant 0 : index
    %c0_3 = arith.constant 0 : index
    %c0_4 = arith.constant 0 : index
    %1 = vector.load %arg3[%c0_2, %c0_3, %c0_4] : memref<1x1x128xf32, #tpu.memory_space<vmem>>, vector<1x1x128xf32>
    %2 = vector.shape_cast %1 : vector<1x1x128xf32> to vector<1x128xf32>
    %3 = vector.shape_cast %2 : vector<1x128xf32> to vector<1x1x128xf32>
    %4 = vector.broadcast %3 : vector<1x1x128xf32> to vector<2x1x128xf32>
    %5 = arith.addf %0, %4 : vector<2x1x128xf32>
    %c0_5 = arith.constant 0 : index
    %c0_6 = arith.constant 0 : index
    %c0_7 = arith.constant 0 : index
    %6 = vector.load %arg4[%c0_5, %c0_6, %c0_7] : memref<2x1x128xf32, #tpu.memory_space<vmem>>, vector<2x1x128xf32>
    tpu.vector_store %arg4[%c0_5, %c0_6, %c0_7], %5 {strides = array<i32>} : memref<2x1x128xf32, #tpu.memory_space<vmem>>, vector<2x1x128xf32>,
    return
  }
  func.func @transform_0(%arg0: i32, %arg1: i32) -> (i32, i32, i32) {
    %c0_i32 = arith.constant 0 : i32
    %c0_i32_0 = arith.constant 0 : i32
    return %arg1, %arg0, %c0_i32 : i32, i32, i32
  }
  func.func @transform_1(%arg0: i32, %arg1: i32) -> (i32, i32, i32) {
    %c0_i32 = arith.constant 0 : i32
    %c0_i32_0 = arith.constant 0 : i32
    %c0_i32_1 = arith.constant 0 : i32
    return %c0_i32, %arg0, %c0_i32_0 : i32, i32, i32
  }
  func.func @transform_2(%arg0: i32, %arg1: i32) -> (i32, i32, i32) {
    %c0_i32 = arith.constant 0 : i32
    %c0_i32_0 = arith.constant 0 : i32
    return %arg1, %arg0, %c0_i32 : i32, i32, i32
  }
}

</mosaic_0001>

<llo_original>
// kernel: tpu_custom_call.1
$region0: #{tpu_custom_call.1}
  #allocation0 [shape = 'u32[]', space=smem, size = 0x4, offset = 0x4, fixed_abs, tag = 'smem constant byte address 0x4 - core index']
  #allocation1 [shape = 'u32[144,128]{1,0:T(1,128)}', space=vmem, size = 0x12000, scoped, tag = 'internal scratch']
  %s0 = inlined_call_operand.hbm [shape: f32[2,1,128], index: 0, kind: input, shape index: {}]
  %s1 = inlined_call_operand.vmem [shape: f32[1,1,128], index: 1, kind: input, shape index: {}]
  %s2 = inlined_call_operand.hbm [shape: f32[2,1,128], index: 2, kind: output, shape index: {}]
  %s3 = sld [smem:[#allocation0]]
  $region22: #{tpu_custom_call.1} parent=0
    _
  %s5 = ssub.s32 1, %s3
  %s6 = scalar_select 0, %s5, %s3
  $region1: #{tpu_custom_call.1} parent=0
    #allocation2 [shape = 'u8[1024]{0}', space=vmem, size = 0x400, scoped, tag = 'input window, operand 0, single buffered']
    #allocation3 [shape = 's32[1]{0}', space=sflag, size = 0x4, scoped, tag = 'scoped memory for tpu_custom_call.1']
    #allocation4 [shape = 's32[1]{0}', space=sflag, size = 0x4, scoped, tag = 'scoped memory for tpu_custom_call.1']
    #allocation5 [shape = 'u8[1024]{0}', space=vmem, size = 0x400, scoped, tag = 'output window, operand 0, single buffered']
    %7 = vsyncpa [#allocation3], 0
    %8 = vsyncpa [#allocation4], 0
    // Predicated region
    $region2: #{tpu_custom_call.1} parent=1 // pred_check
      _
    $region3: #{tpu_custom_call.1} parent=1 // pred_check_branch
      %10 = sbr.rel (0) target = $region5
    $region4: #{tpu_custom_call.1} parent=1 // pred_region
      %s12 = ssub.s32 32, 32
      %13 = vsyncadd [#allocation3], %s12
      %s14 = sshll.u32 [#allocation2], 4
      %s15 = int_to_ptr.vmem [resolvable:$true] %s14
      %20 = dma.hbm_to_vmem [thread:$0]  %s0, 32, %s15, [#allocation3], 16, 16, 1
    $region5: #{tpu_custom_call.1} parent=1 // pred_fallthru
      _
    // Predicated region
    $region6: #{tpu_custom_call.1} parent=1 // pred_check
      _
    $region7: #{tpu_custom_call.1} parent=1 // pred_check_branch
      %22 = sbr.rel (0) target = $region9
    $region8: #{tpu_custom_call.1} parent=1 // pred_region
      _
    $region9: #{tpu_custom_call.1} parent=1 // pred_fallthru
      _
    // Predicated region
    $region10: #{tpu_custom_call.1} parent=1 // pred_check
      _
    $region11: #{tpu_custom_call.1} parent=1 // pred_check_branch
      %24 = sbr.rel (0) target = $region13
    $region12: #{tpu_custom_call.1} parent=1 // pred_region
      %25 = dma.done [#allocation3], 32
    $region13: #{tpu_custom_call.1} parent=1 // pred_fallthru
      _
    %v26 = vld [vmem:[#allocation2] sm:$0x1]
    %v27 = vld [vmem:[#allocation2 + $0x1] sm:$0x1]
    %v28 = vld [vmem:[%s1] sm:$0x1]
    %v29 = vadd.f32 %v26, %v28
    %v30 = vadd.f32 %v27, %v28
    %31 = vst [vmem:[#allocation5] sm:$0x1] %v29
    %32 = vst [vmem:[#allocation5 + $0x1] sm:$0x1] %v30
    // Predicated region
    $region14: #{tpu_custom_call.1} parent=1 // pred_check
      _
    $region15: #{tpu_custom_call.1} parent=1 // pred_check_branch
      %34 = sbr.rel (0) target = $region17
    $region16: #{tpu_custom_call.1} parent=1 // pred_region
      %s36 = ssub.s32 32, 32
      %37 = vsyncadd [#allocation4], %s36
      %s38 = sshll.u32 [#allocation5], 4
      %s39 = int_to_ptr.vmem [resolvable:$true] %s38
      %44 = dma.vmem_to_hbm [thread:$0]  %s39, 32, %s2, [#allocation4], 16, 16, 1
    $region17: #{tpu_custom_call.1} parent=1 // pred_fallthru
      _
    // Predicated region
    $region18: #{tpu_custom_call.1} parent=1 // pred_check
      _
    $region19: #{tpu_custom_call.1} parent=1 // pred_check_branch
      %46 = sbr.rel (0) target = $region21
    $region20: #{tpu_custom_call.1} parent=1 // pred_region
      %47 = dma.done [#allocation4], 32
    $region21: #{tpu_custom_call.1} parent=1 // pred_fallthru
      _
    %48 = vsyncpa [#allocation3], 1
    %49 = vsyncpa [#allocation4], 1

</llo_original>
